<compile_context>
chip_gen: v7x
topology: tpu7x:2x2x1
jax: 0.10.0
libtpu: 0.0.40
codegen_flags: <defaults>
</compile_context>

<pallas_src>
import functools

import jax
import jax.numpy as jnp
from jax.experimental import pallas as pl
from jax.experimental.pallas import tpu as pltpu


def _ceil_to(x, m):
    return -(-x // m) * m


# ------------------------------------------------------------------
# Pallas kernels
# ------------------------------------------------------------------
def _gemm_kernel(a_ref, b_ref, bias_ref, o_ref, *, relu):
    acc = jnp.dot(a_ref[...], b_ref[...], preferred_element_type=jnp.float32)
    y = acc + bias_ref[...]
    if relu:
        y = jnp.maximum(y, 0.0)
    o_ref[...] = y.astype(o_ref.dtype)


def _gemm_res_kernel(a_ref, b_ref, bias_ref, r_ref, o_ref, *, relu):
    acc = jnp.dot(a_ref[...], b_ref[...], preferred_element_type=jnp.float32)
    y = acc + bias_ref[...] + r_ref[...].astype(jnp.float32)
    if relu:
        y = jnp.maximum(y, 0.0)
    o_ref[...] = y.astype(o_ref.dtype)


def gemm_fused(a, w_p, bias_p, residual=None, *, relu=False, n_valid=None,
               out_dtype=jnp.bfloat16, tm=256, tn=256):
    """out[:M,:N] = act(a @ w + bias [+ residual]).

    a:        (M, K)   activations (cast to bf16 inside).
    w_p:      (Kp, Np) pre-padded bf16 weights, Kp = ceil8(K), Np = ceil128(N).
    bias_p:   (Np,)    f32 per-column shift (folded BN / linear bias).
    residual: optional (M, N) tensor added before the activation.
    Single full-K block (no k grid axis, no accumulator scratch).
    """
    M, K = a.shape
    Kp, Np = w_p.shape
    assert K <= Kp
    N = Np if n_valid is None else n_valid

    # M tiling: biggest tile <= tm that keeps blocks (8,128)-friendly.
    if M <= tm:
        tm_eff = _ceil_to(M, 8)
    else:
        tm_eff = tm
    Mp = _ceil_to(M, tm_eff)

    # N tiling: Np is always a multiple of 128 (weight prep).
    if Np <= tn:
        tn_eff = Np
    elif Np % tn == 0:
        tn_eff = tn
    else:
        tn_eff = 128

    a_p = jnp.pad(a.astype(jnp.bfloat16), ((0, Mp - M), (0, Kp - K)))
    bias2d = bias_p.reshape(1, Np)

    in_specs = [
        pl.BlockSpec((tm_eff, Kp), lambda i, j: (i, 0)),
        pl.BlockSpec((Kp, tn_eff), lambda i, j: (0, j)),
        pl.BlockSpec((1, tn_eff), lambda i, j: (0, j)),
    ]
    args = [a_p, w_p, bias2d]
    if residual is not None:
        rM, rN = residual.shape
        r_p = jnp.pad(residual.astype(jnp.bfloat16),
                      ((0, Mp - rM), (0, Np - rN)))
        in_specs.append(pl.BlockSpec((tm_eff, tn_eff), lambda i, j: (i, j)))
        args.append(r_p)
        kernel = functools.partial(_gemm_res_kernel, relu=relu)
    else:
        kernel = functools.partial(_gemm_kernel, relu=relu)

    out = pl.pallas_call(
        kernel,
        out_shape=jax.ShapeDtypeStruct((Mp, Np), out_dtype),
        grid_spec=pltpu.PrefetchScalarGridSpec(
            num_scalar_prefetch=0,
            grid=(Mp // tm_eff, Np // tn_eff),
            in_specs=in_specs,
            out_specs=pl.BlockSpec((tm_eff, tn_eff), lambda i, j: (i, j)),
        ),
        compiler_params=pltpu.CompilerParams(
            dimension_semantics=("parallel", "parallel")),
    )(*args)
    return out[:M, :N]


def _max_axis1_kernel(x_ref, o_ref):
    o_ref[...] = jnp.max(x_ref[...], axis=1)


def max_axis1(x3d, *, tr=512):
    """Max-reduce over axis 1 of a (M, K, C) array, tiled over rows."""
    M, K, C = x3d.shape
    tr_eff = _ceil_to(M, 8) if M <= tr else tr
    Mp = _ceil_to(M, tr_eff)
    x_p = jnp.pad(x3d, ((0, Mp - M), (0, 0), (0, 0)))
    out = pl.pallas_call(
        _max_axis1_kernel,
        out_shape=jax.ShapeDtypeStruct((Mp, C), x3d.dtype),
        grid_spec=pltpu.PrefetchScalarGridSpec(
            num_scalar_prefetch=0,
            grid=(Mp // tr_eff,),
            in_specs=[pl.BlockSpec((tr_eff, K, C), lambda i: (i, 0, 0))],
            out_specs=pl.BlockSpec((tr_eff, C), lambda i: (i, 0)),
        ),
        compiler_params=pltpu.CompilerParams(dimension_semantics=("parallel",)),
    )(x_p)
    return out[:M]


# ------------------------------------------------------------------
# NN building blocks (glue around the Pallas kernels)
# ------------------------------------------------------------------
def conv2d_fused(x, cw, stride, padding, *, relu, residual=None,
                 out_dtype=jnp.bfloat16):
    """Conv (no bias) with folded BN (+ optional residual, ReLU) fused into the
    GEMM epilogue.  x: NHWC bf16;  cw: prepared weight dict."""
    B, H, W, Cin = x.shape
    KH, KW, Cout = cw["kh"], cw["kw"], cw["n"]
    OH = (H + 2 * padding - KH) // stride + 1
    OW = (W + 2 * padding - KW) // stride + 1
    xp = jnp.pad(x, ((0, 0), (padding, padding), (padding, padding), (0, 0)))
    pats = [xp[:, kh:kh + stride * OH:stride, kw:kw + stride * OW:stride, :]
            for kh in range(KH) for kw in range(KW)]
    a = jnp.stack(pats, axis=3).reshape(B * OH * OW, KH * KW * Cin)
    res2d = None if residual is None else residual.reshape(B * OH * OW, Cout)
    out = gemm_fused(a, cw["w"], cw["b"], res2d, relu=relu,
                     n_valid=Cout, out_dtype=out_dtype)
    return out.reshape(B, OH, OW, Cout)


def maxpool_3x3_s2_p1(x):
    B, H, W, C = x.shape
    OH = (H + 2 - 3) // 2 + 1
    OW = (W + 2 - 3) // 2 + 1
    neg = jnp.finfo(x.dtype).min
    xp = jnp.pad(x, ((0, 0), (1, 1), (1, 1), (0, 0)), constant_values=neg)
    pats = [xp[:, kh:kh + 2 * OH:2, kw:kw + 2 * OW:2, :]
            for kh in range(3) for kw in range(3)]
    stk = jnp.stack(pats, axis=3).reshape(B * OH * OW, 9, C)
    return max_axis1(stk).reshape(B, OH, OW, C)


def global_max_pool(x):
    """adaptive_max_pool2d(x, 1) + flatten -> (B, C)."""
    B, H, W, C = x.shape
    return max_axis1(x.reshape(B, H * W, C))


def basic_block(x, blk):
    if "down" in blk:
        identity = conv2d_fused(x, blk["down"], blk["stride"], 0, relu=False)
    else:
        identity = x
    out = conv2d_fused(x, blk["conv1"], blk["stride"], 1, relu=True)
    # conv2 + bn2 + residual add + relu, all in one GEMM epilogue
    out = conv2d_fused(out, blk["conv2"], 1, 1, relu=True, residual=identity)
    return out


def backbone_forward(x, bb):
    """x: (B, H, W, 1) NHWC bf16 spectrogram -> (B, 512)."""
    x = conv2d_fused(x, bb["conv1"], 2, 3, relu=True)   # conv1 + bn1 + relu
    x = maxpool_3x3_s2_p1(x)                            # resnet maxpool
    for layer in bb["layers"]:                          # layer1 .. layer4
        for blk in layer:
            x = basic_block(x, blk)
    return global_max_pool(x)


def encoder_forward(params, spectrogram, position_info):
    """spectrogram: (B, audio_num, H, W);  position_info: (B, 7*audio_num)."""
    B, A, H, W = spectrogram.shape
    # audio_num merged into the batch: one backbone pass instead of A passes.
    x = spectrogram.reshape(B * A, H, W, 1).astype(jnp.bfloat16)
    feats = backbone_forward(x, params["backbone"])         # (B*A, 512)
    h = feats.reshape(B, A * 512).astype(jnp.float32)       # matches torch.cat order
    x = jnp.concatenate([h, position_info.astype(jnp.float32)], axis=-1)
    lw = params["linear"]
    return gemm_fused(x, lw["w"], lw["b"], relu=False,
                      n_valid=lw["n"], out_dtype=jnp.float32)


def decoder_forward(params, h):
    x = gemm_fused(h, params["l1"]["w"], params["l1"]["b"], relu=True,
                   n_valid=params["l1"]["n"], out_dtype=jnp.float32)
    x = gemm_fused(x, params["l2"]["w"], params["l2"]["b"], relu=True,
                   n_valid=params["l2"]["n"], out_dtype=jnp.float32)
    x = gemm_fused(x, params["l3"]["w"], params["l3"]["b"], relu=False,
                   n_valid=params["l3"]["n"], out_dtype=jnp.float32)
    B = h.shape[0]
    return x.reshape(B, 3, params["num_coarse"])             # y_coarse


def autoencoder_forward(params, batch):
    spec = batch["spectrogram"]
    spec = spec[:, :, :, :spec.shape[2]]                      # square crop (as in torch)
    position_info = jnp.stack(
        [jnp.stack([jnp.concatenate([j["rot"], j["pos"]]) for j in item])
         for item in batch["camera_info"]])
    position_info = position_info.reshape(position_info.shape[0], -1)
    h = encoder_forward(params["encoder"], spec, position_info)
    y_coarse = decoder_forward(params["decoder"], h)
    global_pred_points = jnp.transpose(y_coarse, (0, 2, 1))
    return {"h": h, "global_pred_points": global_pred_points}


# ------------------------------------------------------------------
# Deterministic synthetic parameter init + one-time weight preparation
# (fold BN, transpose to (K, N), pad to (8,128)-friendly shapes, cast bf16)
# ------------------------------------------------------------------
def _conv_raw(key, cout, cin, kh, kw):
    return 0.02 * jax.random.normal(key, (cout, cin, kh, kw), jnp.float32)


def _bn_raw(key, c):
    k1, k2, k3 = jax.random.split(key, 3)
    return dict(
        gamma=1.0 + 0.02 * jax.random.normal(k1, (c,), jnp.float32),
        beta=jnp.zeros((c,), jnp.float32),
        mean=0.01 * jax.random.normal(k2, (c,), jnp.float32),
        var=1.0 + 0.1 * jnp.abs(jax.random.normal(k3, (c,), jnp.float32)),
    )


def _prep_conv_bn(w, bn, eps=1e-5):
    scale = bn["gamma"] * jax.lax.rsqrt(bn["var"] + eps)
    shift = bn["beta"] - bn["mean"] * scale
    w = w * scale[:, None, None, None]                       # fold BN scale
    Cout, Cin, KH, KW = w.shape
    wm = jnp.transpose(w, (2, 3, 1, 0)).reshape(KH * KW * Cin, Cout)
    K, N = wm.shape
    Kp, Np = _ceil_to(K, 8), _ceil_to(N, 128)
    return dict(
        w=jnp.pad(wm, ((0, Kp - K), (0, Np - N))).astype(jnp.bfloat16),
        b=jnp.pad(shift, (0, Np - N)).astype(jnp.float32),
        n=N, kh=KH, kw=KW)


def _prep_linear(w, b):
    wm = w.T                                                 # (in, out)
    K, N = wm.shape
    Kp, Np = _ceil_to(K, 8), _ceil_to(N, 128)
    return dict(
        w=jnp.pad(wm, ((0, Kp - K), (0, Np - N))).astype(jnp.bfloat16),
        b=jnp.pad(b, (0, Np - N)).astype(jnp.float32),
        n=N)


def _prep_linear_bn(w, b, bn, eps=1e-5):
    scale = bn["gamma"] * jax.lax.rsqrt(bn["var"] + eps)
    shift = bn["beta"] - bn["mean"] * scale
    return _prep_linear(w * scale[:, None], b * scale + shift)


def init_autoencoder_params(key, audio_num, num_coarse=1024 * 4):
    keys = iter(jax.random.split(key, 64))
    nk = lambda: next(keys)

    backbone = dict(
        conv1=_prep_conv_bn(_conv_raw(nk(), 64, 1, 7, 7), _bn_raw(nk(), 64)),
        layers=[])
    # resnet18 layer configs: (in_ch, out_ch, first-block stride)
    for cin, cout, stride in [(64, 64, 1), (64, 128, 2), (128, 256, 2), (256, 512, 2)]:
        blk0 = dict(
            stride=stride,
            conv1=_prep_conv_bn(_conv_raw(nk(), cout, cin, 3, 3), _bn_raw(nk(), cout)),
            conv2=_prep_conv_bn(_conv_raw(nk(), cout, cout, 3, 3), _bn_raw(nk(), cout)))
        if stride != 1 or cin != cout:
            blk0["down"] = _prep_conv_bn(_conv_raw(nk(), cout, cin, 1, 1),
                                         _bn_raw(nk(), cout))
        blk1 = dict(
            stride=1,
            conv1=_prep_conv_bn(_conv_raw(nk(), cout, cout, 3, 3), _bn_raw(nk(), cout)),
            conv2=_prep_conv_bn(_conv_raw(nk(), cout, cout, 3, 3), _bn_raw(nk(), cout)))
        backbone["layers"].append([blk0, blk1])

    in_features = 512 * audio_num + 7 * audio_num
    enc_linear = _prep_linear(
        0.02 * jax.random.normal(nk(), (1024, in_features), jnp.float32),
        jnp.zeros((1024,), jnp.float32))

    decoder = dict(
        l1=_prep_linear_bn(0.02 * jax.random.normal(nk(), (1024, 1024), jnp.float32),
                           jnp.zeros((1024,), jnp.float32), _bn_raw(nk(), 1024)),
        l2=_prep_linear_bn(0.02 * jax.random.normal(nk(), (1024, 1024), jnp.float32),
                           jnp.zeros((1024,), jnp.float32), _bn_raw(nk(), 1024)),
        l3=_prep_linear(0.02 * jax.random.normal(nk(), (3 * num_coarse, 1024), jnp.float32),
                        jnp.zeros((3 * num_coarse,), jnp.float32)),
        num_coarse=num_coarse)

    return dict(encoder=dict(backbone=backbone, linear=enc_linear),
                decoder=decoder)


# ------------------------------------------------------------------
if __name__ == "__main__":
    key = jax.random.PRNGKey(0)
    k_param, k_spec, k_cam = jax.random.split(key, 3)

    B, audio_num, H, W = 2, 2, 64, 64
    num_coarse = 1024 * 4
    params = init_autoencoder_params(k_param, audio_num, num_coarse)

    spectrogram = jax.random.normal(k_spec, (B, audio_num, H, W), jnp.float32)
    cam = jax.random.normal(k_cam, (B, audio_num, 7), jnp.float32)
    camera_info = [[dict(rot=cam[b, a, :4], pos=cam[b, a, 4:])
                    for a in range(audio_num)] for b in range(B)]
    batch = dict(spectrogram=spectrogram, camera_info=camera_info)

    out = autoencoder_forward(params, batch)
    jax.block_until_ready(out["h"])
    jax.block_until_ready(out["global_pred_points"])

    assert out["h"].shape == (B, 1024), out["h"].shape
    assert out["global_pred_points"].shape == (B, num_coarse, 3), \
        out["global_pred_points"].shape
    assert bool(jnp.all(jnp.isfinite(out["h"])))
    assert bool(jnp.all(jnp.isfinite(out["global_pred_points"])))
    print("KERNEL_OK")
</pallas_src>

<mosaic_0001>
module attributes {stable_mosaic.version = 11 : i64} {
  func.func @_gemm_kernel(%arg0: i32, %arg1: i32, %arg2: memref<256x56xbf16, #tpu.memory_space<vmem>>, %arg3: memref<56x128xbf16, #tpu.memory_space<vmem>>, %arg4: memref<1x128xf32, #tpu.memory_space<vmem>>, %arg5: memref<256x128xbf16, #tpu.memory_space<vmem>>) attributes {dimension_semantics = [#tpu.dimension_semantics<parallel>, #tpu.dimension_semantics<parallel>], iteration_bounds = array<i64: 16, 1>, scalar_prefetch = 0 : i64, scratch_operands = 0 : i64, tpu.core_type = #tpu.core_type<tc>, window_params = [{transform_indices = @transform_0, window_bounds = array<i64: 256, 56>}, {transform_indices = @transform_1, window_bounds = array<i64: 56, 128>}, {transform_indices = @transform_2, window_bounds = array<i64: 1, 128>}, {transform_indices = @transform_3, window_bounds = array<i64: 256, 128>}]} {
    %c0 = arith.constant 0 : index
    %c0_0 = arith.constant 0 : index
    %0 = vector.load %arg2[%c0, %c0_0] : memref<256x56xbf16, #tpu.memory_space<vmem>>, vector<256x56xbf16>
    %c0_1 = arith.constant 0 : index
    %c0_2 = arith.constant 0 : index
    %1 = vector.load %arg3[%c0_1, %c0_2] : memref<56x128xbf16, #tpu.memory_space<vmem>>, vector<56x128xbf16>
    %cst = arith.constant dense<0.000000e+00> : vector<256x128xf32>
    %2 = tpu.matmul %0, %1, %cst {dimension_numbers = #tpu.dot_dimension_numbers<[1], [0], [0], [1], [0, 0, 1, 1], [], []>} : vector<256x56xbf16>, vector<56x128xbf16>, vector<256x128xf32> -> vector<256x128xf32>
    %c0_3 = arith.constant 0 : index
    %c0_4 = arith.constant 0 : index
    %3 = vector.load %arg4[%c0_3, %c0_4] : memref<1x128xf32, #tpu.memory_space<vmem>>, vector<1x128xf32>
    %4 = vector.broadcast %3 : vector<1x128xf32> to vector<256x128xf32>
    %5 = arith.addf %2, %4 : vector<256x128xf32>
    %cst_5 = arith.constant 0.000000e+00 : f32
    %6 = vector.broadcast %cst_5 : f32 to vector<256x128xf32>
    %7 = arith.maximumf %5, %6 : vector<256x128xf32>
    %8 = arith.truncf %7 : vector<256x128xf32> to vector<256x128xbf16>
    %c0_6 = arith.constant 0 : index
    %c0_7 = arith.constant 0 : index
    %9 = vector.load %arg5[%c0_6, %c0_7] : memref<256x128xbf16, #tpu.memory_space<vmem>>, vector<256x128xbf16>
    tpu.vector_store %arg5[%c0_6, %c0_7], %8 {strides = array<i32>} : memref<256x128xbf16, #tpu.memory_space<vmem>>, vector<256x128xbf16>,
    return
  }
  func.func @transform_0(%arg0: i32, %arg1: i32) -> (i32, i32) {
    %c0_i32 = arith.constant 0 : i32
    %c0_i32_0 = arith.constant 0 : i32
    return %arg0, %c0_i32 : i32, i32
  }
  func.func @transform_1(%arg0: i32, %arg1: i32) -> (i32, i32) {
    %c0_i32 = arith.constant 0 : i32
    %c0_i32_0 = arith.constant 0 : i32
    return %c0_i32, %arg1 : i32, i32
  }
  func.func @transform_2(%arg0: i32, %arg1: i32) -> (i32, i32) {
    %c0_i32 = arith.constant 0 : i32
    %c0_i32_0 = arith.constant 0 : i32
    return %c0_i32, %arg1 : i32, i32
  }
  func.func @transform_3(%arg0: i32, %arg1: i32) -> (i32, i32) {
    %c0_i32 = arith.constant 0 : i32
    return %arg0, %arg1 : i32, i32
  }
}

</mosaic_0001>

<llo_original>
// kernel: tpu_custom_call.1
$region0: #{tpu_custom_call.1}
  #allocation0 [shape = 'u32[]', space=smem, size = 0x4, offset = 0x4, fixed_abs, tag = 'smem constant byte address 0x4 - core index']
  #allocation1 [shape = 'u32[144,128]{1,0:T(1,128)}', space=vmem, size = 0x12000, scoped, tag = 'internal scratch']
  %s0 = inlined_call_operand.vmem [shape: bf16[4096,56], index: 0, kind: input, shape index: {}]
  %s1 = inlined_call_operand.vmem [shape: bf16[56,128], index: 1, kind: input, shape index: {}]
  %s2 = inlined_call_operand.vmem [shape: f32[1,128], index: 2, kind: input, shape index: {}]
  %s3 = inlined_call_operand.hbm [shape: bf16[4096,128], index: 3, kind: output, shape index: {}]
  %s4 = sld [smem:[#allocation0]]
  $region45: #{tpu_custom_call.1} parent=0
    _
  %s6 = ssub.s32 1, %s4
  %s7 = scalar_select 0, %s6, %s4
  $region1: #{tpu_custom_call.1} parent=0
    #allocation2 [shape = 'u8[131072]{0}', space=vmem, size = 0x20000, scoped, tag = 'output window, operand 0']
    #allocation3 [shape = 's32[2]{0}', space=sflag, size = 0x8, scoped, tag = 'scoped memory for tpu_custom_call.1']
    %8 = vsyncpa [#allocation3], 0
    %s9 = scalar_lea.sflag [#allocation3], 1
    %10 = vsyncpa %s9, 0
    loop: start=0, step=1, limit=18
    $region2: #{tpu_custom_call.1} parent=1 // loop_pre_header
      _
    $region3: #{tpu_custom_call.1} parent=1 // loop_header
      %s12 = sphi 0, %s16
      %p13 = scmp.ge.s32.totalorder %s12, 18
      %s19 = sphi 0, %s31
      %s20 = sphi 0, %s27
      %s21 = sphi 0, %s19
      %s22 = sphi 0, %s20
      %s23 = sphi 0, %s21
      %s24 = sphi 0, %s22
      %s34 = sphi 0, %s36
      %s37 = sphi 0, %s34
      %s38 = sphi 0, %s37
      %s54 = sphi 0, %s38
      %s60 = sphi 0, %s62
      %s63 = sphi 0, %s60
      %s64 = sphi 0, %s63
      %s80 = sphi 0, %s64
      %s86 = sphi 0, %s88
      %s89 = sphi 0, %s86
      %s90 = sphi 0, %s89
      %s106 = sphi 0, %s90
      %s114 = sphi 0, %s116
      %s117 = sphi 0, %s114
      %s118 = sphi 0, %s117
      %s134 = sphi 0, %s118
    $region4: #{tpu_custom_call.1} parent=1 // loop_header_branch
      %15 = sbr.rel (%p13) target = $region8
    $region5: #{tpu_custom_call.1} parent=1 // loop_body
      %s17 = ssub.s32 %s12, 1
      %s18 = ssub.s32 %s12, 2
      %s25 = sadd.s32 1, %s20
      %p26 = scmp.ge.s32.totalorder %s25, 1
      %s27 = scalar_select %p26, 0, %s25
      %s28 = sadd.s32 1, %s19
      %s29 = scalar_select %p26, %s28, %s19
      %p30 = scmp.ge.s32.totalorder %s29, 16
      %s31 = scalar_select %p30, 0, %s29
      %s32 = ssub.s32 %s19, %s31
      %p33 = scmp.eq.s32.totalorder %s32, 0
      %s35 = sadd.s32 %s34, 1
      %s36 = scalar_select %p33, %s34, %s35
      %p39 = pneg %p33
      %p40 = scmp.eq.s32.totalorder %s12, 15
      %p41 = por %p39, %p40
      %p42 = scmp.ne.s32.totalorder %s34, %s37
      %p43 = scmp.eq.s32.totalorder %s12, 0
      %p44 = por %p42, %p43
      %p45 = scmp.ne.s32.totalorder %s34, %s37
      %p46 = scmp.eq.s32.totalorder %s17, 15
      %p47 = por %p45, %p46
      %p48 = scmp.ne.s32.totalorder %s37, %s38
      %p49 = scmp.eq.s32.totalorder %s17, 0
      %p50 = por %p48, %p49
      %p51 = scmp.ne.s32.totalorder %s37, %s38
      %p52 = scmp.eq.s32.totalorder %s18, 15
      %p53 = por %p51, %p52
      %p55 = scmp.ne.s32.totalorder %s38, %s54
      %p56 = scmp.eq.s32.totalorder %s18, 0
      %p57 = por %p55, %p56
      %s58 = ssub.s32 %s20, %s27
      %p59 = scmp.eq.s32.totalorder %s58, 0
      %s61 = sadd.s32 %s60, 1
      %s62 = scalar_select %p59, %s60, %s61
      %p65 = pneg %p59
      %p66 = scmp.eq.s32.totalorder %s12, 15
      %p67 = por %p65, %p66
      %p68 = scmp.ne.s32.totalorder %s60, %s63
      %p69 = scmp.eq.s32.totalorder %s12, 0
      %p70 = por %p68, %p69
      %p71 = scmp.ne.s32.totalorder %s60, %s63
      %p72 = scmp.eq.s32.totalorder %s17, 15
      %p73 = por %p71, %p72
      %p74 = scmp.ne.s32.totalorder %s63, %s64
      %p75 = scmp.eq.s32.totalorder %s17, 0
      %p76 = por %p74, %p75
      %p77 = scmp.ne.s32.totalorder %s63, %s64
      %p78 = scmp.eq.s32.totalorder %s18, 15
      %p79 = por %p77, %p78
      %p81 = scmp.ne.s32.totalorder %s64, %s80
      %p82 = scmp.eq.s32.totalorder %s18, 0
      %p83 = por %p81, %p82
      %s84 = ssub.s32 %s20, %s27
      %p85 = scmp.eq.s32.totalorder %s84, 0
      %s87 = sadd.s32 %s86, 1
      %s88 = scalar_select %p85, %s86, %s87
      %p91 = pneg %p85
      %p92 = scmp.eq.s32.totalorder %s12, 15
      %p93 = por %p91, %p92
      %p94 = scmp.ne.s32.totalorder %s86, %s89
      %p95 = scmp.eq.s32.totalorder %s12, 0
      %p96 = por %p94, %p95
      %p97 = scmp.ne.s32.totalorder %s86, %s89
      %p98 = scmp.eq.s32.totalorder %s17, 15
      %p99 = por %p97, %p98
      %p100 = scmp.ne.s32.totalorder %s89, %s90
      %p101 = scmp.eq.s32.totalorder %s17, 0
      %p102 = por %p100, %p101
      %p103 = scmp.ne.s32.totalorder %s89, %s90
      %p104 = scmp.eq.s32.totalorder %s18, 15
      %p105 = por %p103, %p104
      %p107 = scmp.ne.s32.totalorder %s90, %s106
      %p108 = scmp.eq.s32.totalorder %s18, 0
      %p109 = por %p107, %p108
      %s110 = ssub.s32 %s19, %s31
      %s111 = ssub.s32 %s20, %s27
      %s112 = sor.u32 %s110, %s111
      %p113 = scmp.eq.s32.totalorder %s112, 0
      %s115 = sadd.s32 %s114, 1
      %s116 = scalar_select %p113, %s114, %s115
      %p119 = pneg %p113
      %p120 = scmp.eq.s32.totalorder %s12, 15
      %p121 = por %p119, %p120
      %p122 = scmp.ne.s32.totalorder %s114, %s117
      %p123 = scmp.eq.s32.totalorder %s12, 0
      %p124 = por %p122, %p123
      %p125 = scmp.ne.s32.totalorder %s114, %s117
      %p126 = scmp.eq.s32.totalorder %s17, 15
      %p127 = por %p125, %p126
      %p128 = scmp.ne.s32.totalorder %s117, %s118
      %p129 = scmp.eq.s32.totalorder %s17, 0
      %p130 = por %p128, %p129
      %p131 = scmp.ne.s32.totalorder %s117, %s118
      %p132 = scmp.eq.s32.totalorder %s18, 15
      %p133 = por %p131, %p132
      %p135 = scmp.ne.s32.totalorder %s118, %s134
      %p136 = scmp.eq.s32.totalorder %s18, 0
      %p137 = por %p135, %p136
      %p138 = scmp.le.s32.totalorder 1, %s12
      %p139 = scmp.lt.s32.totalorder %s12, 17
      %p140 = pnand %p138, %p139
      %p141 = pneg %p140
      // Predicated region
      $region9: #{tpu_custom_call.1} parent=5 // pred_check
        _
      $region10: #{tpu_custom_call.1} parent=5 // pred_check_branch
        %143 = sbr.rel (%p140) target = $region12
      $region11: #{tpu_custom_call.1} parent=5 // pred_region
        %s144 = ssub.s32 %s12, 1
        // Predicated region
        $region13: #{tpu_custom_call.1} parent=11 // pred_check
          %p145 = pneg %p76
        $region14: #{tpu_custom_call.1} parent=11 // pred_check_branch
          %147 = sbr.rel (%p145) target = $region16
        $region15: #{tpu_custom_call.1} parent=11 // pred_region
          %p148 = scmp.lt.s32.totalorder %s22, 0
          %s149 = scalar_select %p148, %s22, 0
          %s150 = smul.addr %s149, 4
          %s151 = scalar_lea.vmem %s1, %s150
        $region16: #{tpu_custom_call.1} parent=11 // pred_fallthru
          _
        // Predicated region
        $region17: #{tpu_custom_call.1} parent=11 // pred_check
          %p152 = pneg %p102
        $region18: #{tpu_custom_call.1} parent=11 // pred_check_branch
          %154 = sbr.rel (%p152) target = $region20
        $region19: #{tpu_custom_call.1} parent=11 // pred_region
          %p155 = scmp.lt.s32.totalorder %s22, 0
          %s156 = scalar_select %p155, %s22, 0
          %s157 = scalar_lea.vmem %s2, %s156
        $region20: #{tpu_custom_call.1} parent=11 // pred_fallthru
          _
      $region12: #{tpu_custom_call.1} parent=5 // pred_fallthru
        _
      %p158 = scmp.lt.s32.totalorder %s12, 16
      // Predicated region
      $region21: #{tpu_custom_call.1} parent=5 // pred_check
        %p159 = pneg %p158
      $region22: #{tpu_custom_call.1} parent=5 // pred_check_branch
        %161 = sbr.rel (%p159) target = $region24
      $region23: #{tpu_custom_call.1} parent=5 // pred_region
        // Predicated region
        $region25: #{tpu_custom_call.1} parent=23 // pred_check
          %p162 = pneg %p44
        $region26: #{tpu_custom_call.1} parent=23 // pred_check_branch
          %164 = sbr.rel (%p162) target = $region28
        $region27: #{tpu_custom_call.1} parent=23 // pred_region
          %s165 = smul.u32 32, %s19
          %p166 = scmp.lt.s32.totalorder %s165, 511
          %s167 = scalar_select %p166, %s165, 511
          %s168 = smul.addr %s167, 4
          %s169 = scalar_lea.vmem %s0, %s168
          %s170 = smul.u32 32, %s19
        $region28: #{tpu_custom_call.1} parent=23 // pred_fallthru
          _
      $region24: #{tpu_custom_call.1} parent=5 // pred_fallthru
        _
      %p171 = scmp.le.s32.totalorder 1, %s12
      %p172 = scmp.lt.s32.totalorder %s12, 17
      %p173 = pnand %p171, %p172
      %p174 = pneg %p173
      // Predicated region
      $region29: #{tpu_custom_call.1} parent=5 // pred_check
        _
      $region30: #{tpu_custom_call.1} parent=5 // pred_check_branch
        %176 = sbr.rel (%p173) target = $region32
      $region31: #{tpu_custom_call.1} parent=5 // pred_region
        %s177 = ssub.s32 %s12, 1
        %s178 = smul.u32 32, %s21
        %p179 = scmp.lt.s32.totalorder %s178, 511
        %s180 = scalar_select %p179, %s178, 511
        %s181 = smul.addr %s180, 4
        %s182 = scalar_lea.vmem %s0, %s181
        %p183 = pneg %p50
        %p184 = pneg %p47
        %p185 = scmp.lt.s32.totalorder %s22, 0
        %s186 = scalar_select %p185, %s22, 0
        %s187 = smul.addr %s186, 4
        %s188 = scalar_lea.vmem %s1, %s187
        %p189 = pneg %p76
        %p190 = pneg %p73
        %p191 = scmp.lt.s32.totalorder %s22, 0
        %s192 = scalar_select %p191, %s22, 0
        %s193 = scalar_lea.vmem %s2, %s192
        %p194 = pneg %p102
        %p195 = pneg %p99
        %p196 = pneg %p130
        %p197 = pneg %p127
        %s198 = sand.u32 %s117, 1
        %s199 = scalar_lea.sflag [#allocation3], %s198
        %s200 = sand.u32 %s117, 1
        %s201 = smul.addr %s200, 128
        %s202 = scalar_lea.vmem [#allocation2], %s201
        %s203 = smul.u32 32, %s21
        %p204 = scmp.lt.s32.totalorder %s203, 511
        %s205 = scalar_select %p204, %s203, 511
        %s206 = smul.addr %s205, 4
        %s207 = scalar_lea.vmem %s0, %s206
        %s208 = smul.u32 32, %s21
        %p209 = scmp.lt.s32.totalorder %s22, 0
        %s210 = scalar_select %p209, %s22, 0
        %s211 = smul.addr %s210, 4
        %s212 = scalar_lea.vmem %s1, %s211
        %p213 = scmp.lt.s32.totalorder %s22, 0
        %s214 = scalar_select %p213, %s22, 0
        %s215 = scalar_lea.vmem %s2, %s214
        %s216 = smul.u32 32, %s21
        %v218 = vld [vmem:[%s207] sm:$0xf]
        %v219 = vld [vmem:[%s207 + $0x4] sm:$0xf]
        %v220 = vld [vmem:[%s207 + $0x8] sm:$0xf]
        %v221 = vld [vmem:[%s207 + $0xc] sm:$0xf]
        %v222 = vld [vmem:[%s207 + $0x10] sm:$0xf]
        %v223 = vld [vmem:[%s207 + $0x14] sm:$0xf]
        %v224 = vld [vmem:[%s207 + $0x18] sm:$0xf]
        %v225 = vld [vmem:[%s207 + $0x1c] sm:$0xf]
        %v226 = vld [vmem:[%s207 + $0x20] sm:$0xf]
        %v227 = vld [vmem:[%s207 + $0x24] sm:$0xf]
        %v228 = vld [vmem:[%s207 + $0x28] sm:$0xf]
        %v229 = vld [vmem:[%s207 + $0x2c] sm:$0xf]
        %v230 = vld [vmem:[%s207 + $0x30] sm:$0xf]
        %v231 = vld [vmem:[%s207 + $0x34] sm:$0xf]
        %v232 = vld [vmem:[%s207 + $0x38] sm:$0xf]
        %v233 = vld [vmem:[%s207 + $0x3c] sm:$0xf]
        %v234 = vld [vmem:[%s207 + $0x40] sm:$0xf]
        %v235 = vld [vmem:[%s207 + $0x44] sm:$0xf]
        %v236 = vld [vmem:[%s207 + $0x48] sm:$0xf]
        %v237 = vld [vmem:[%s207 + $0x4c] sm:$0xf]
        %v238 = vld [vmem:[%s207 + $0x50] sm:$0xf]
        %v239 = vld [vmem:[%s207 + $0x54] sm:$0xf]
        %v240 = vld [vmem:[%s207 + $0x58] sm:$0xf]
        %v241 = vld [vmem:[%s207 + $0x5c] sm:$0xf]
        %v242 = vld [vmem:[%s207 + $0x60] sm:$0xf]
        %v243 = vld [vmem:[%s207 + $0x64] sm:$0xf]
        %v244 = vld [vmem:[%s207 + $0x68] sm:$0xf]
        %v245 = vld [vmem:[%s207 + $0x6c] sm:$0xf]
        %v246 = vld [vmem:[%s207 + $0x70] sm:$0xf]
        %v247 = vld [vmem:[%s207 + $0x74] sm:$0xf]
        %v248 = vld [vmem:[%s207 + $0x78] sm:$0xf]
        %v249 = vld [vmem:[%s207 + $0x7c] sm:$0xf]
        %v250 = vld [vmem:[%s212] sm:$0xf]
        %v251 = vld [vmem:[%s212 + $0x4] sm:$0xf]
        %v252 = vld [vmem:[%s212 + $0x8] sm:$0xf]
        %v253 = vld [vmem:[%s212 + $0xc] sm:$0xf]
        %v254 = vld [vmem:[%s212 + $0x10] sm:$0xf]
        %v255 = vld [vmem:[%s212 + $0x14] sm:$0xf]
        %v256 = vld [vmem:[%s212 + $0x18] sm:$0xf]
        %v257 = vld [vmem:[%s215] sm:$0x1]
        %v259 = vlaneseq
        %v260 = vshrl.u32 %v259, 7
        %v261 = vsub.s32 0, %v260
        %v262 = vrot.slane %v257, %v261
        %v296 = vunpack.c.l.b16 %v218
        %v297 = vunpack.c.l.b16 %v219
        %v298 = vunpack.c.l.b16 %v220
        %v299 = vunpack.c.l.b16 %v221
        %v300 = vunpack.c.l.b16 %v222
        %v301 = vunpack.c.l.b16 %v223
        %v302 = vunpack.c.l.b16 %v224
        %v303 = vunpack.c.l.b16 %v225
        %v304 = vunpack.c.l.b16 %v226
        %v305 = vunpack.c.l.b16 %v227
        %v306 = vunpack.c.l.b16 %v228
        %v307 = vunpack.c.l.b16 %v229
        %v308 = vunpack.c.l.b16 %v230
        %v309 = vunpack.c.l.b16 %v231
        %v310 = vunpack.c.l.b16 %v232
        %v311 = vunpack.c.l.b16 %v233
        %v312 = vunpack.c.l.b16 %v234
        %v313 = vunpack.c.l.b16 %v235
        %v314 = vunpack.c.l.b16 %v236
        %v315 = vunpack.c.l.b16 %v237
        %v316 = vunpack.c.l.b16 %v238
        %v317 = vunpack.c.l.b16 %v239
        %v318 = vunpack.c.l.b16 %v240
        %v319 = vunpack.c.l.b16 %v241
        %v320 = vunpack.c.l.b16 %v242
        %v321 = vunpack.c.l.b16 %v243
        %v322 = vunpack.c.l.b16 %v244
        %v323 = vunpack.c.l.b16 %v245
        %v324 = vunpack.c.l.b16 %v246
        %v325 = vunpack.c.l.b16 %v247
        %v326 = vunpack.c.l.b16 %v248
        %v327 = vunpack.c.l.b16 %v249
        %v328 = vpack.c.b16 %v297, %v296
        %v329 = vpack.c.b16 %v299, %v298
        %v330 = vpack.c.b16 %v301, %v300
        %v331 = vpack.c.b16 %v303, %v302
        %v332 = vpack.c.b16 %v305, %v304
        %v333 = vpack.c.b16 %v307, %v306
        %v334 = vpack.c.b16 %v309, %v308
        %v335 = vpack.c.b16 %v311, %v310
        %v336 = vpack.c.b16 %v313, %v312
        %v337 = vpack.c.b16 %v315, %v314
        %v338 = vpack.c.b16 %v317, %v316
        %v339 = vpack.c.b16 %v319, %v318
        %v340 = vpack.c.b16 %v321, %v320
        %v341 = vpack.c.b16 %v323, %v322
        %v342 = vpack.c.b16 %v325, %v324
        %v343 = vpack.c.b16 %v327, %v326
        %v351 = vunpack.c.l.b16 %v250
        %v352 = vunpack.c.l.b16 %v251
        %v353 = vunpack.c.l.b16 %v252
        %v354 = vunpack.c.l.b16 %v253
        %v355 = vunpack.c.l.b16 %v254
        %v356 = vunpack.c.l.b16 %v255
        %v357 = vunpack.c.l.b16 %v256
        %v358 = vpack.c.b16 %v352, %v351
        %v359 = vpack.c.b16 %v354, %v353
        %v360 = vpack.c.b16 %v356, %v355
        %v361 = vpack.c.b16 %v357, %v357
        %vm365 = vcmask 457728
        %v367 = vsel %vm365, %v328, 0
        %v370 = vsel %vm365, %v329, 0
        %v373 = vsel %vm365, %v330, 0
        %v376 = vsel %vm365, %v331, 0
        %v379 = vsel %vm365, %v332, 0
        %v382 = vsel %vm365, %v333, 0
        %v385 = vsel %vm365, %v334, 0
        %v388 = vsel %vm365, %v335, 0
        %v391 = vsel %vm365, %v336, 0
        %v394 = vsel %vm365, %v337, 0
        %v397 = vsel %vm365, %v338, 0
        %v400 = vsel %vm365, %v339, 0
        %v403 = vsel %vm365, %v340, 0
        %v406 = vsel %vm365, %v341, 0
        %v409 = vsel %vm365, %v342, 0
        %v412 = vsel %vm365, %v343, 0
        %vm414 = vcmask 1043456
        %v416 = vsel %vm414, %v361, 0
        %418 = vmatprep.subr.bf16.mxu0 0
        %419 = vmatpush1.bf16.msra.mxu0 %v358
        %420 = vmatprep.subr.bf16.mxu0 0
        %421 = vmatpush1.bf16.msra.mxu0 %v359
        %422 = vmatprep.subr.bf16.mxu0 0
        %423 = vmatpush1.bf16.msra.mxu0 %v360
        %424 = vmatprep.subr.bf16.mxu0 0
        %425 = vmatpush1.bf16.msra.mxu0 %v416
        %426 = vmatprep.subr.bf16.mxu0 0
        %427 = vmatpush1.bf16.msra.mxu0 0
        %428 = vmatprep.subr.bf16.mxu0 0
        %429 = vmatpush1.bf16.msra.mxu0 0
        %430 = vmatprep.subr.bf16.mxu0 0
        %431 = vmatpush1.bf16.msra.mxu0 0
        %432 = vmatprep.subr.bf16.mxu0 0
        %433 = vmatpush1.bf16.msra.mxu0 0
        %434 = vmatprep.subr.bf16.mxu0 0
        %435 = vmatpush1.bf16.msra.mxu0 0
        %436 = vmatprep.subr.bf16.mxu0 0
        %437 = vmatpush1.bf16.msra.mxu0 0
        %438 = vmatprep.subr.bf16.mxu0 0
        %439 = vmatpush1.bf16.msra.mxu0 0
        %440 = vmatprep.subr.bf16.mxu0 0
        %441 = vmatpush1.bf16.msra.mxu0 0
        %442 = vmatprep.subr.bf16.mxu0 0
        %443 = vmatpush1.bf16.msra.mxu0 0
        %444 = vmatprep.subr.bf16.mxu0 0
        %445 = vmatpush1.bf16.msra.mxu0 0
        %446 = vmatprep.subr.bf16.mxu0 0
        %447 = vmatpush1.bf16.msra.mxu0 0
        %448 = vmatprep.subr.bf16.mxu0 0
        %449 = vmatpush1.bf16.msra.mxu0 0
        %450 = vmatprep.mubr.bf16.mxu0 0
        %451 = vmatmul.mubr.bf16.gmra.mrb[0].mxu0 %v367
        %v452 = vpop.f32.mrb[0].mxu0
        %v453 = vadd.f32 %v262, %v452
        %v454 = vpop.f32.mrb[0].mxu0
        %v455 = vpop.f32.mrb[0].mxu0
        %v456 = vadd.f32 %v262, %v455
        %v457 = vpop.f32.mrb[0].mxu0
        %458 = vmatprep.mubr.bf16.mxu0 0
        %459 = vmatmul.mubr.bf16.gmra.mrb[0].mxu0 %v370
        %v460 = vpop.f32.mrb[0].mxu0
        %v461 = vadd.f32 %v262, %v460
        %v462 = vpop.f32.mrb[0].mxu0
        %v463 = vpop.f32.mrb[0].mxu0
        %v464 = vadd.f32 %v262, %v463
        %v465 = vpop.f32.mrb[0].mxu0
        %466 = vmatprep.mubr.bf16.mxu0 0
        %467 = vmatmul.mubr.bf16.gmra.mrb[0].mxu0 %v373
        %v468 = vpop.f32.mrb[0].mxu0
        %v469 = vadd.f32 %v262, %v468
        %v470 = vpop.f32.mrb[0].mxu0
        %v471 = vpop.f32.mrb[0].mxu0
        %v472 = vadd.f32 %v262, %v471
        %v473 = vpop.f32.mrb[0].mxu0
        %474 = vmatprep.mubr.bf16.mxu0 0
        %475 = vmatmul.mubr.bf16.gmra.mrb[0].mxu0 %v376
        %v476 = vpop.f32.mrb[0].mxu0
        %v477 = vadd.f32 %v262, %v476
        %v478 = vpop.f32.mrb[0].mxu0
        %v479 = vpop.f32.mrb[0].mxu0
        %v480 = vadd.f32 %v262, %v479
        %v481 = vpop.f32.mrb[0].mxu0
        %482 = vmatprep.mubr.bf16.mxu0 0
        %483 = vmatmul.mubr.bf16.gmra.mrb[0].mxu0 %v379
        %v484 = vpop.f32.mrb[0].mxu0
        %v485 = vadd.f32 %v262, %v484
        %v486 = vpop.f32.mrb[0].mxu0
        %v487 = vpop.f32.mrb[0].mxu0
        %v488 = vadd.f32 %v262, %v487
        %v489 = vpop.f32.mrb[0].mxu0
        %490 = vmatprep.mubr.bf16.mxu0 0
        %491 = vmatmul.mubr.bf16.gmra.mrb[0].mxu0 %v382
        %v492 = vpop.f32.mrb[0].mxu0
        %v493 = vadd.f32 %v262, %v492
        %v494 = vpop.f32.mrb[0].mxu0
        %v495 = vpop.f32.mrb[0].mxu0
        %v496 = vadd.f32 %v262, %v495
        %v497 = vpop.f32.mrb[0].mxu0
        %498 = vmatprep.mubr.bf16.mxu0 0
        %499 = vmatmul.mubr.bf16.gmra.mrb[0].mxu0 %v385
        %v500 = vpop.f32.mrb[0].mxu0
        %v501 = vadd.f32 %v262, %v500
        %v502 = vpop.f32.mrb[0].mxu0
        %v503 = vpop.f32.mrb[0].mxu0
        %v504 = vadd.f32 %v262, %v503
        %v505 = vpop.f32.mrb[0].mxu0
        %506 = vmatprep.mubr.bf16.mxu0 0
        %507 = vmatmul.mubr.bf16.gmra.mrb[0].mxu0 %v388
        %v508 = vpop.f32.mrb[0].mxu0
        %v509 = vadd.f32 %v262, %v508
        %v510 = vpop.f32.mrb[0].mxu0
        %v511 = vpop.f32.mrb[0].mxu0
        %v512 = vadd.f32 %v262, %v511
        %v513 = vpop.f32.mrb[0].mxu0
        %514 = vmatprep.mubr.bf16.mxu0 0
        %515 = vmatmul.mubr.bf16.gmra.mrb[0].mxu0 %v391
        %v516 = vpop.f32.mrb[0].mxu0
        %v517 = vadd.f32 %v262, %v516
        %v518 = vpop.f32.mrb[0].mxu0
        %v519 = vpop.f32.mrb[0].mxu0
        %v520 = vadd.f32 %v262, %v519
        %v521 = vpop.f32.mrb[0].mxu0
        %522 = vmatprep.mubr.bf16.mxu0 0
        %523 = vmatmul.mubr.bf16.gmra.mrb[0].mxu0 %v394
        %v524 = vpop.f32.mrb[0].mxu0
        %v525 = vadd.f32 %v262, %v524
        %v526 = vpop.f32.mrb[0].mxu0
        %v527 = vpop.f32.mrb[0].mxu0
        %v528 = vadd.f32 %v262, %v527
        %v529 = vpop.f32.mrb[0].mxu0
        %530 = vmatprep.mubr.bf16.mxu0 0
        %531 = vmatmul.mubr.bf16.gmra.mrb[0].mxu0 %v397
        %v532 = vpop.f32.mrb[0].mxu0
        %v533 = vadd.f32 %v262, %v532
        %v534 = vpop.f32.mrb[0].mxu0
        %v535 = vpop.f32.mrb[0].mxu0
        %v536 = vadd.f32 %v262, %v535
        %v537 = vpop.f32.mrb[0].mxu0
        %538 = vmatprep.mubr.bf16.mxu0 0
        %539 = vmatmul.mubr.bf16.gmra.mrb[0].mxu0 %v400
        %v540 = vpop.f32.mrb[0].mxu0
        %v541 = vadd.f32 %v262, %v540
        %v542 = vpop.f32.mrb[0].mxu0
        %v543 = vpop.f32.mrb[0].mxu0
        %v544 = vadd.f32 %v262, %v543
        %v545 = vpop.f32.mrb[0].mxu0
        %546 = vmatprep.mubr.bf16.mxu0 0
        %547 = vmatmul.mubr.bf16.gmra.mrb[0].mxu0 %v403
        %v548 = vpop.f32.mrb[0].mxu0
        %v549 = vadd.f32 %v262, %v548
        %v550 = vpop.f32.mrb[0].mxu0
        %v551 = vpop.f32.mrb[0].mxu0
        %v552 = vadd.f32 %v262, %v551
        %v553 = vpop.f32.mrb[0].mxu0
        %554 = vmatprep.mubr.bf16.mxu0 0
        %555 = vmatmul.mubr.bf16.gmra.mrb[0].mxu0 %v406
        %v556 = vpop.f32.mrb[0].mxu0
        %v557 = vadd.f32 %v262, %v556
        %v558 = vpop.f32.mrb[0].mxu0
        %v559 = vpop.f32.mrb[0].mxu0
        %v560 = vadd.f32 %v262, %v559
        %v561 = vpop.f32.mrb[0].mxu0
        %562 = vmatprep.mubr.bf16.mxu0 0
        %563 = vmatmul.mubr.bf16.gmra.mrb[0].mxu0 %v409
        %v564 = vpop.f32.mrb[0].mxu0
        %v565 = vadd.f32 %v262, %v564
        %v566 = vpop.f32.mrb[0].mxu0
        %v567 = vpop.f32.mrb[0].mxu0
        %v568 = vadd.f32 %v262, %v567
        %v569 = vpop.f32.mrb[0].mxu0
        %570 = vmatprep.mubr.bf16.mxu0 0
        %571 = vmatmul.mubr.bf16.gmra.mrb[0].mxu0 %v412
        %v572 = vpop.f32.mrb[0].mxu0
        %v573 = vadd.f32 %v262, %v572
        %v574 = vpop.f32.mrb[0].mxu0
        %v575 = vpop.f32.mrb[0].mxu0
        %v576 = vadd.f32 %v262, %v575
        %v577 = vpop.f32.mrb[0].mxu0
        %578 = vdwg.mxu0
        %v579 = vmax.f32 %v453, 0.0
        %v580 = vmax.f32 %v456, 0.0
        %v581 = vmax.f32 %v461, 0.0
        %v582 = vmax.f32 %v464, 0.0
        %v583 = vmax.f32 %v469, 0.0
        %v584 = vmax.f32 %v472, 0.0
        %v585 = vmax.f32 %v477, 0.0
        %v586 = vmax.f32 %v480, 0.0
        %v587 = vmax.f32 %v485, 0.0
        %v588 = vmax.f32 %v488, 0.0
        %v589 = vmax.f32 %v493, 0.0
        %v590 = vmax.f32 %v496, 0.0
        %v591 = vmax.f32 %v501, 0.0
        %v592 = vmax.f32 %v504, 0.0
        %v593 = vmax.f32 %v509, 0.0
        %v594 = vmax.f32 %v512, 0.0
        %v595 = vmax.f32 %v517, 0.0
        %v596 = vmax.f32 %v520, 0.0
        %v597 = vmax.f32 %v525, 0.0
        %v598 = vmax.f32 %v528, 0.0
        %v599 = vmax.f32 %v533, 0.0
        %v600 = vmax.f32 %v536, 0.0
        %v601 = vmax.f32 %v541, 0.0
        %v602 = vmax.f32 %v544, 0.0
        %v603 = vmax.f32 %v549, 0.0
        %v604 = vmax.f32 %v552, 0.0
        %v605 = vmax.f32 %v557, 0.0
        %v606 = vmax.f32 %v560, 0.0
        %v607 = vmax.f32 %v565, 0.0
        %v608 = vmax.f32 %v568, 0.0
        %v609 = vmax.f32 %v573, 0.0
        %v610 = vmax.f32 %v576, 0.0
        %v611 = vpack.c.bf16 %v580, %v579
        %v612 = vpack.c.bf16 %v582, %v581
        %v613 = vpack.c.bf16 %v584, %v583
        %v614 = vpack.c.bf16 %v586, %v585
        %v615 = vpack.c.bf16 %v588, %v587
        %v616 = vpack.c.bf16 %v590, %v589
        %v617 = vpack.c.bf16 %v592, %v591
        %v618 = vpack.c.bf16 %v594, %v593
        %v619 = vpack.c.bf16 %v596, %v595
        %v620 = vpack.c.bf16 %v598, %v597
        %v621 = vpack.c.bf16 %v600, %v599
        %v622 = vpack.c.bf16 %v602, %v601
        %v623 = vpack.c.bf16 %v604, %v603
        %v624 = vpack.c.bf16 %v606, %v605
        %v625 = vpack.c.bf16 %v608, %v607
        %v626 = vpack.c.bf16 %v610, %v609
        %v643 = vunpack.c.l.b16 %v611
        %v644 = vunpack.c.h.b16 %v611
        %v645 = vunpack.c.l.b16 %v612
        %v646 = vunpack.c.h.b16 %v612
        %v647 = vunpack.c.l.b16 %v613
        %v648 = vunpack.c.h.b16 %v613
        %v649 = vunpack.c.l.b16 %v614
        %v650 = vunpack.c.h.b16 %v614
        %v651 = vunpack.c.l.b16 %v615
        %v652 = vunpack.c.h.b16 %v615
        %v653 = vunpack.c.l.b16 %v616
        %v654 = vunpack.c.h.b16 %v616
        %v655 = vunpack.c.l.b16 %v617
        %v656 = vunpack.c.h.b16 %v617
        %v657 = vunpack.c.l.b16 %v618
        %v658 = vunpack.c.h.b16 %v618
        %v659 = vunpack.c.l.b16 %v619
        %v660 = vunpack.c.h.b16 %v619
        %v661 = vunpack.c.l.b16 %v620
        %v662 = vunpack.c.h.b16 %v620
        %v663 = vunpack.c.l.b16 %v621
        %v664 = vunpack.c.h.b16 %v621
        %v665 = vunpack.c.l.b16 %v622
        %v666 = vunpack.c.h.b16 %v622
        %v667 = vunpack.c.l.b16 %v623
        %v668 = vunpack.c.h.b16 %v623
        %v669 = vunpack.c.l.b16 %v624
        %v670 = vunpack.c.h.b16 %v624
        %v671 = vunpack.c.l.b16 %v625
        %v672 = vunpack.c.h.b16 %v625
        %v673 = vunpack.c.l.b16 %v626
        %v674 = vunpack.c.h.b16 %v626
        %v675 = vpack.c.b16 %v643, %v643
        %v676 = vpack.c.b16 %v644, %v644
        %v677 = vpack.c.b16 %v645, %v645
        %v678 = vpack.c.b16 %v646, %v646
        %v679 = vpack.c.b16 %v647, %v647
        %v680 = vpack.c.b16 %v648, %v648
        %v681 = vpack.c.b16 %v649, %v649
        %v682 = vpack.c.b16 %v650, %v650
        %v683 = vpack.c.b16 %v651, %v651
        %v684 = vpack.c.b16 %v652, %v652
        %v685 = vpack.c.b16 %v653, %v653
        %v686 = vpack.c.b16 %v654, %v654
        %v687 = vpack.c.b16 %v655, %v655
        %v688 = vpack.c.b16 %v656, %v656
        %v689 = vpack.c.b16 %v657, %v657
        %v690 = vpack.c.b16 %v658, %v658
        %v691 = vpack.c.b16 %v659, %v659
        %v692 = vpack.c.b16 %v660, %v660
        %v693 = vpack.c.b16 %v661, %v661
        %v694 = vpack.c.b16 %v662, %v662
        %v695 = vpack.c.b16 %v663, %v663
        %v696 = vpack.c.b16 %v664, %v664
        %v697 = vpack.c.b16 %v665, %v665
        %v698 = vpack.c.b16 %v666, %v666
        %v699 = vpack.c.b16 %v667, %v667
        %v700 = vpack.c.b16 %v668, %v668
        %v701 = vpack.c.b16 %v669, %v669
        %v702 = vpack.c.b16 %v670, %v670
        %v703 = vpack.c.b16 %v671, %v671
        %v704 = vpack.c.b16 %v672, %v672
        %v705 = vpack.c.b16 %v673, %v673
        %v706 = vpack.c.b16 %v674, %v674
        %739 = vst [vmem:[%s202] sm:$0xf] %v675
        %740 = vst [vmem:[%s202 + $0x4] sm:$0xf] %v676
        %741 = vst [vmem:[%s202 + $0x8] sm:$0xf] %v677
        %742 = vst [vmem:[%s202 + $0xc] sm:$0xf] %v678
        %743 = vst [vmem:[%s202 + $0x10] sm:$0xf] %v679
        %744 = vst [vmem:[%s202 + $0x14] sm:$0xf] %v680
        %745 = vst [vmem:[%s202 + $0x18] sm:$0xf] %v681
        %746 = vst [vmem:[%s202 + $0x1c] sm:$0xf] %v682
        %747 = vst [vmem:[%s202 + $0x20] sm:$0xf] %v683
        %748 = vst [vmem:[%s202 + $0x24] sm:$0xf] %v684
        %749 = vst [vmem:[%s202 + $0x28] sm:$0xf] %v685
        %750 = vst [vmem:[%s202 + $0x2c] sm:$0xf] %v686
        %751 = vst [vmem:[%s202 + $0x30] sm:$0xf] %v687
        %752 = vst [vmem:[%s202 + $0x34] sm:$0xf] %v688
        %753 = vst [vmem:[%s202 + $0x38] sm:$0xf] %v689
        %754 = vst [vmem:[%s202 + $0x3c] sm:$0xf] %v690
        %755 = vst [vmem:[%s202 + $0x40] sm:$0xf] %v691
        %756 = vst [vmem:[%s202 + $0x44] sm:$0xf] %v692
        %757 = vst [vmem:[%s202 + $0x48] sm:$0xf] %v693
        %758 = vst [vmem:[%s202 + $0x4c] sm:$0xf] %v694
        %759 = vst [vmem:[%s202 + $0x50] sm:$0xf] %v695
        %760 = vst [vmem:[%s202 + $0x54] sm:$0xf] %v696
        %761 = vst [vmem:[%s202 + $0x58] sm:$0xf] %v697
        %762 = vst [vmem:[%s202 + $0x5c] sm:$0xf] %v698
        %763 = vst [vmem:[%s202 + $0x60] sm:$0xf] %v699
        %764 = vst [vmem:[%s202 + $0x64] sm:$0xf] %v700
        %765 = vst [vmem:[%s202 + $0x68] sm:$0xf] %v701
        %766 = vst [vmem:[%s202 + $0x6c] sm:$0xf] %v702
        %767 = vst [vmem:[%s202 + $0x70] sm:$0xf] %v703
        %768 = vst [vmem:[%s202 + $0x74] sm:$0xf] %v704
        %769 = vst [vmem:[%s202 + $0x78] sm:$0xf] %v705
        %770 = vst [vmem:[%s202 + $0x7c] sm:$0xf] %v706
        %s771 = sand.u32 %s117, 1
        %s772 = scalar_lea.sflag [#allocation3], %s771
        %s773 = sand.u32 %s117, 1
        %s774 = smul.addr %s773, 128
        %s775 = scalar_lea.vmem [#allocation2], %s774
        // Predicated region
        $region33: #{tpu_custom_call.1} parent=31 // pred_check
          %p776 = pneg %p127
        $region34: #{tpu_custom_call.1} parent=31 // pred_check_branch
          %778 = sbr.rel (%p776) target = $region36
        $region35: #{tpu_custom_call.1} parent=31 // pred_region
          %s779 = smul.u32 32, %s21
          %s781 = ssub.s32 2048, 2048
          %782 = vsyncadd %s772, %s781
          %s783 = sadd.s32 %s22, %s779
          %s784 = smul.addr %s783, 64
          %s785 = scalar_lea.hbm %s3, %s784
          %s786 = sshll.u32 %s775, 4
          %s787 = int_to_ptr.vmem [resolvable:$true] %s786
          %792 = dma.vmem_to_hbm [thread:$0]  %s787, 2048, %s785, %s772, 64, 64, 4
        $region36: #{tpu_custom_call.1} parent=31 // pred_fallthru
          _
      $region32: #{tpu_custom_call.1} parent=5 // pred_fallthru
        _
      %p793 = scmp.le.s32.totalorder 2, %s12
      // Predicated region
      $region37: #{tpu_custom_call.1} parent=5 // pred_check
        %p794 = pneg %p793
      $region38: #{tpu_custom_call.1} parent=5 // pred_check_branch
        %796 = sbr.rel (%p794) target = $region40
      $region39: #{tpu_custom_call.1} parent=5 // pred_region
        %s797 = ssub.s32 %s12, 2
        // Predicated region
        $region41: #{tpu_custom_call.1} parent=39 // pred_check
          %p798 = pneg %p133
        $region42: #{tpu_custom_call.1} parent=39 // pred_check_branch
          %800 = sbr.rel (%p798) target = $region44
        $region43: #{tpu_custom_call.1} parent=39 // pred_region
          %s801 = sand.u32 %s118, 1
          %s802 = scalar_lea.sflag [#allocation3], %s801
          %s803 = sand.u32 %s118, 1
          %s804 = smul.addr %s803, 128
          %s805 = scalar_lea.vmem [#allocation2], %s804
          %806 = dma.done %s802, 2048
        $region44: #{tpu_custom_call.1} parent=39 // pred_fallthru
          _
      $region40: #{tpu_custom_call.1} parent=5 // pred_fallthru
        _
    $region6: #{tpu_custom_call.1} parent=1 // loop_footer
      %s16 = sadd.s32 1, %s12
    $region7: #{tpu_custom_call.1} parent=1 // loop_footer_branch
      %11 = sbr.rel target = $region3
    $region8: #{tpu_custom_call.1} parent=1 // loop_exit
      _
    %807 = vsyncpa [#allocation3], 1
    %s808 = scalar_lea.sflag [#allocation3], 1
    %809 = vsyncpa %s808, 1

</llo_original>
